<compile_context>
chip_gen: v7x
topology: tpu7x:2x2x1
jax: 0.10.0
libtpu: 0.0.40
codegen_flags: <defaults>
</compile_context>

<pallas_src>
import functools

import jax
import jax.numpy as jnp
from jax import lax
from jax.experimental import pallas as pl
from jax.experimental.pallas import tpu as pltpu


_ROW_TILE_CAP = 512             # rows per grid step (amortize per-step overhead)
_ONEHOT_TMP_BYTES = 4 << 20     # cap on the per-tile (tm, num_nodes) f32 one-hot
_ONEHOT_MAX_TABLE_ROWS = 8192   # beyond this, one-hot matmul is no longer a win
_VMEM_SLACK_BYTES = 2 << 20     # headroom for Mosaic internals


def _sublane_pack(dtype) -> int:
    """Second-to-last-dim tiling requirement per dtype (f32:8, bf16:16, int8:32)."""
    itemsize = jnp.dtype(dtype).itemsize
    return {4: 8, 2: 16, 1: 32}.get(itemsize, 8)


def _vmem_budget_bytes() -> int:
    """Per-core VMEM budget for the resident-table path."""
    try:
        cap = int(pltpu.get_tpu_info().vmem_capacity_bytes)
    except Exception:
        cap = 64 << 20  # conservative: v7x per-TensorCore physical VMEM
    return (cap * 3) // 4


def _onehot_gather_kernel(ids_ref, table_ref, out_ref, *, num_nodes):
    """out[r, :] = table[ids[r], :] for the tile, as a one-hot matmul on the MXU."""
    ids = ids_ref[...]                                        # (tm, 1) int32
    tm = out_ref.shape[0]
    col = lax.broadcasted_iota(jnp.int32, (tm, num_nodes), 1)  # (tm, num_nodes)
    onehot = (col == ids).astype(table_ref.dtype)              # broadcast (tm,1)
    # HIGHEST precision keeps the f32 selection exact (multi-pass MXU).
    out_ref[...] = jnp.dot(
        onehot,
        table_ref[...],
        preferred_element_type=jnp.float32,
        precision=lax.Precision.HIGHEST,
    ).astype(out_ref.dtype)


def embedding_lookup(node_ids, emb_table):
    """Pallas gather: out[i, :] = emb_table[node_ids[i], :]."""
    node_ids = jnp.asarray(node_ids).reshape(-1).astype(jnp.int32)
    n = node_ids.shape[0]
    num_nodes, h = emb_table.shape
    itemsize = jnp.dtype(emb_table.dtype).itemsize

    # Clamp out-of-range ids (one-hot would otherwise produce silent zero rows).
    node_ids = jnp.clip(node_ids, 0, num_nodes - 1)

    pack = _sublane_pack(emb_table.dtype)

    # Rows per grid step: multiple of the dtype sublane pack, bounded by the
    # row cap, the one-hot temp budget, and the actual number of lookups.
    max_rows_onehot = max(pack, (_ONEHOT_TMP_BYTES // (4 * num_nodes)) // pack * pack)
    tm = min(_ROW_TILE_CAP, max_rows_onehot, pack * pl.cdiv(n, pack))
    tm = max(pack, int(tm))

    table_bytes = num_nodes * h * itemsize
    vmem_needed = (
        2 * table_bytes            # resident table (assume double-buffered)
        + 2 * tm * h * itemsize    # output double buffer
        + 2 * tm * 4               # id-tile double buffer
        + tm * num_nodes * 4       # one-hot temporary
        + _VMEM_SLACK_BYTES
    )
    budget = _vmem_budget_bytes()

    if num_nodes > _ONEHOT_MAX_TABLE_ROWS or vmem_needed > budget:
        # TODO(synk): implement a pl.ANY + manual make_async_copy batched
        # row-gather (deep buffering) for tables too large for the
        # VMEM-resident one-hot path; fall back to an XLA gather for now.
        return jnp.take(emb_table, node_ids, axis=0)

    # Pad ids so the grid tiles exactly; pad rows gather row 0 and are sliced off.
    n_pad = pl.cdiv(n, tm) * tm
    if n_pad != n:
        node_ids = jnp.pad(node_ids, (0, n_pad - n))
    ids2d = node_ids.reshape(n_pad, 1)

    kernel = functools.partial(_onehot_gather_kernel, num_nodes=num_nodes)

    out = pl.pallas_call(
        kernel,
        out_shape=jax.ShapeDtypeStruct((n_pad, h), emb_table.dtype),
        grid_spec=pltpu.PrefetchScalarGridSpec(
            num_scalar_prefetch=0,
            grid=(n_pad // tm,),
            in_specs=[
                # Per-tile id block (no whole-vector SMEM residency).
                pl.BlockSpec((tm, 1), lambda i: (i, 0)),
                # Full-extent table block, constant block index -> DMA'd once,
                # VMEM-resident across the whole grid.
                pl.BlockSpec((num_nodes, h), lambda i: (0, 0)),
            ],
            out_specs=pl.BlockSpec((tm, h), lambda i: (i, 0)),
        ),
        compiler_params=pltpu.CompilerParams(
            dimension_semantics=("parallel",),
            vmem_limit_bytes=int(budget),
        ),
    )(ids2d, emb_table)

    return out[:n]


class EmbeddingLayerPallas:
    """JAX/Pallas analogue of the PyTorch EmbeddingLayer module."""

    def __init__(self, num_nodes, h_dim, key):
        # torch.nn.Embedding default init: N(0, 1)
        self.weight = jax.random.normal(key, (num_nodes, h_dim), dtype=jnp.float32)

    def __call__(self, node_id):
        # mirrors `node_id = g.ndata['id'].squeeze()` — robust to (N, 1), (N,)
        # and (1, 1) shapes (reshape(-1) never produces a 0-d array).
        node_id = jnp.asarray(node_id).reshape(-1)
        return embedding_lookup(node_id, self.weight)


if __name__ == "__main__":
    key = jax.random.PRNGKey(0)
    k_emb, k_ids = jax.random.split(key)

    num_nodes = 64   # embedding table rows
    h_dim = 32       # hidden size
    n = 8            # number of graph nodes in the batch

    layer = EmbeddingLayerPallas(num_nodes, h_dim, k_emb)

    # g.ndata['id'] typically has shape [N, 1]
    node_ids = jax.random.randint(k_ids, (n, 1), 0, num_nodes, dtype=jnp.int32)

    out = layer(node_ids)
    out = jax.block_until_ready(out)

    # reference check against plain JAX gather
    ref = jnp.take(layer.weight, node_ids.reshape(-1), axis=0)
    assert out.shape == (n, h_dim)
    assert jnp.allclose(out, ref, rtol=1e-6, atol=1e-6), "Pallas gather mismatch vs reference"

    print("KERNEL_OK")
</pallas_src>

<mosaic_0001>
module attributes {stable_mosaic.version = 11 : i64} {
  func.func @_onehot_gather_kernel(%arg0: i32, %arg1: memref<8x1xi32, #tpu.memory_space<vmem>>, %arg2: memref<64x32xf32, #tpu.memory_space<vmem>>, %arg3: memref<8x32xf32, #tpu.memory_space<vmem>>) attributes {dimension_semantics = [#tpu.dimension_semantics<parallel>], iteration_bounds = array<i64: 1>, scalar_prefetch = 0 : i64, scratch_operands = 0 : i64, tpu.core_type = #tpu.core_type<tc>, window_params = [{transform_indices = @transform_0, window_bounds = array<i64: 8, 1>}, {pipeline_mode = #tpu.pipeline_mode<synchronous>, transform_indices = @transform_1, window_bounds = array<i64: 64, 32>}, {transform_indices = @transform_2, window_bounds = array<i64: 8, 32>}]} {
    %c0 = arith.constant 0 : index
    %c0_0 = arith.constant 0 : index
    %0 = vector.load %arg1[%c0, %c0_0] : memref<8x1xi32, #tpu.memory_space<vmem>>, vector<8x1xi32>
    %1 = tpu.iota {dimensions = array<i32: 1>} : vector<8x64xi32>
    %2 = vector.broadcast %0 : vector<8x1xi32> to vector<8x64xi32>
    %3 = arith.cmpi eq, %1, %2 : vector<8x64xi32>
    %4 = arith.extui %3 : vector<8x64xi1> to vector<8x64xi32>
    %5 = arith.sitofp %4 : vector<8x64xi32> to vector<8x64xf32>
    %c0_1 = arith.constant 0 : index
    %c0_2 = arith.constant 0 : index
    %6 = vector.load %arg2[%c0_1, %c0_2] : memref<64x32xf32, #tpu.memory_space<vmem>>, vector<64x32xf32>
    %cst = arith.constant dense<0.000000e+00> : vector<8x32xf32>
    %7 = tpu.matmul %5, %6, %cst {dimension_numbers = #tpu.dot_dimension_numbers<[1], [0], [0], [1], [0, 0, 1, 1], [], []>, precision = #tpu.contract_precision<fp32>} : vector<8x64xf32>, vector<64x32xf32>, vector<8x32xf32> -> vector<8x32xf32>
    %c0_3 = arith.constant 0 : index
    %c0_4 = arith.constant 0 : index
    %8 = vector.load %arg3[%c0_3, %c0_4] : memref<8x32xf32, #tpu.memory_space<vmem>>, vector<8x32xf32>
    tpu.vector_store %arg3[%c0_3, %c0_4], %7 {strides = array<i32>} : memref<8x32xf32, #tpu.memory_space<vmem>>, vector<8x32xf32>,
    return
  }
  func.func @transform_0(%arg0: i32) -> (i32, i32) {
    %c0_i32 = arith.constant 0 : i32
    %c0_i32_0 = arith.constant 0 : i32
    return %arg0, %c0_i32 : i32, i32
  }
  func.func @transform_1(%arg0: i32) -> (i32, i32) {
    %c0_i32 = arith.constant 0 : i32
    %c0_i32_0 = arith.constant 0 : i32
    %c0_i32_1 = arith.constant 0 : i32
    return %c0_i32, %c0_i32_0 : i32, i32
  }
  func.func @transform_2(%arg0: i32) -> (i32, i32) {
    %c0_i32 = arith.constant 0 : i32
    %c0_i32_0 = arith.constant 0 : i32
    return %arg0, %c0_i32 : i32, i32
  }
}

</mosaic_0001>

<llo_original>
// kernel: tpu_custom_call.1
$region0: #{tpu_custom_call.1}
  #allocation0 [shape = 'u32[]', space=smem, size = 0x4, offset = 0x4, fixed_abs, tag = 'smem constant byte address 0x4 - core index']
  #allocation1 [shape = 'u32[144,128]{1,0:T(1,128)}', space=vmem, size = 0x12000, scoped, tag = 'internal scratch']
  %s0 = inlined_call_operand.vmem [shape: s32[8,1], index: 0, kind: input, shape index: {}]
  %s1 = inlined_call_operand.vmem [shape: f32[64,32], index: 1, kind: input, shape index: {}]
  %s2 = inlined_call_operand.hbm [shape: f32[8,32], index: 2, kind: output, shape index: {}]
  %s3 = sld [smem:[#allocation0]]
  $region18: #{tpu_custom_call.1} parent=0
    _
  %s5 = ssub.s32 1, %s3
  %s6 = scalar_select 0, %s5, %s3
  $region1: #{tpu_custom_call.1} parent=0
    #allocation2 [shape = 'u8[4096]{0}', space=vmem, size = 0x1000, scoped, tag = 'output window, operand 0, single buffered']
    #allocation3 [shape = 's32[1]{0}', space=sflag, size = 0x4, scoped, tag = 'scoped memory for tpu_custom_call.1']
    %7 = vsyncpa [#allocation3], 0
    // Predicated region
    $region2: #{tpu_custom_call.1} parent=1 // pred_check
      _
    $region3: #{tpu_custom_call.1} parent=1 // pred_check_branch
      %9 = sbr.rel (0) target = $region5
    $region4: #{tpu_custom_call.1} parent=1 // pred_region
      _
    $region5: #{tpu_custom_call.1} parent=1 // pred_fallthru
      _
    // Predicated region
    $region6: #{tpu_custom_call.1} parent=1 // pred_check
      _
    $region7: #{tpu_custom_call.1} parent=1 // pred_check_branch
      %11 = sbr.rel (0) target = $region9
    $region8: #{tpu_custom_call.1} parent=1 // pred_region
      _
    $region9: #{tpu_custom_call.1} parent=1 // pred_fallthru
      _
    %v12 = vld [vmem:[%s0] sm:$0xff]
    %v13 = vlaneseq
    %v14 = vand.u32 %v13, 127
    %15 = vset.pattern.permute.xlu0 0
    %16 = vperm.xlu0 %15, %v12
    %v17 = vpop.permute.xlu0 %16
    %vm18 = vcmp.eq.s32.totalorder %v14, %v17
    %v19 = vsel %vm18, 1, 0
    %v20 = vcvt.s32.f32 %v19
    %v21 = vld [vmem:[%s1] sm:$0xff]
    %v22 = vld [vmem:[%s1 + $0x8] sm:$0xff]
    %v23 = vld [vmem:[%s1 + $0x10] sm:$0xff]
    %v24 = vld [vmem:[%s1 + $0x18] sm:$0xff]
    %v25 = vld [vmem:[%s1 + $0x20] sm:$0xff]
    %v26 = vld [vmem:[%s1 + $0x28] sm:$0xff]
    %v27 = vld [vmem:[%s1 + $0x30] sm:$0xff]
    %v28 = vld [vmem:[%s1 + $0x38] sm:$0xff]
    %vm29 = vcmask 523264
    %v31 = vsel %vm29, %v20, 0
    %33 = vmatprep.subr.mxu0 0.0
    %v34 = vand.u32 %v21, 4294901760
    %35 = vmatpush1.msra.mxu0 %v34
    %36 = vmatprep.subr.mxu0 0.0
    %v37 = vand.u32 %v22, 4294901760
    %38 = vmatpush1.msra.mxu0 %v37
    %39 = vmatprep.subr.mxu0 0.0
    %v40 = vand.u32 %v23, 4294901760
    %41 = vmatpush1.msra.mxu0 %v40
    %42 = vmatprep.subr.mxu0 0.0
    %v43 = vand.u32 %v24, 4294901760
    %44 = vmatpush1.msra.mxu0 %v43
    %45 = vmatprep.subr.mxu0 0.0
    %v46 = vand.u32 %v25, 4294901760
    %47 = vmatpush1.msra.mxu0 %v46
    %48 = vmatprep.subr.mxu0 0.0
    %v49 = vand.u32 %v26, 4294901760
    %50 = vmatpush1.msra.mxu0 %v49
    %51 = vmatprep.subr.mxu0 0.0
    %v52 = vand.u32 %v27, 4294901760
    %53 = vmatpush1.msra.mxu0 %v52
    %54 = vmatprep.subr.mxu0 0.0
    %v55 = vand.u32 %v28, 4294901760
    %56 = vmatpush1.msra.mxu0 %v55
    %57 = vmatprep.subr.mxu0 0.0
    %58 = vmatpush1.msra.mxu0 0.0
    %59 = vmatprep.subr.mxu0 0.0
    %60 = vmatpush1.msra.mxu0 0.0
    %61 = vmatprep.subr.mxu0 0.0
    %62 = vmatpush1.msra.mxu0 0.0
    %63 = vmatprep.subr.mxu0 0.0
    %64 = vmatpush1.msra.mxu0 0.0
    %65 = vmatprep.subr.mxu0 0.0
    %66 = vmatpush1.msra.mxu0 0.0
    %67 = vmatprep.subr.mxu0 0.0
    %68 = vmatpush1.msra.mxu0 0.0
    %69 = vmatprep.subr.mxu0 0.0
    %70 = vmatpush1.msra.mxu0 0.0
    %71 = vmatprep.subr.mxu0 0.0
    %72 = vmatpush1.msra.mxu0 0.0
    %73 = vmatprep.subr.mxu0 0.0
    %74 = vmatpush1.msra.mxu0 0.0
    %75 = vmatprep.subr.mxu0 0.0
    %76 = vmatpush1.msra.mxu0 0.0
    %77 = vmatprep.subr.mxu0 0.0
    %78 = vmatpush1.msra.mxu0 0.0
    %79 = vmatprep.subr.mxu0 0.0
    %80 = vmatpush1.msra.mxu0 0.0
    %81 = vmatprep.subr.mxu0 0.0
    %82 = vmatpush1.msra.mxu0 0.0
    %83 = vmatprep.subr.mxu0 0.0
    %84 = vmatpush1.msra.mxu0 0.0
    %85 = vmatprep.subr.mxu0 0.0
    %86 = vmatpush1.msra.mxu0 0.0
    %87 = vmatprep.subr.mxu0 0.0
    %88 = vmatpush1.msra.mxu0 0.0
    %89 = vmatprep.subr.mxu0 0.0
    %90 = vmatpush1.msra.mxu0 0.0
    %91 = vmatprep.subr.mxu0 0.0
    %92 = vmatpush1.msra.mxu0 0.0
    %93 = vmatprep.subr.mxu0 0.0
    %94 = vmatpush1.msra.mxu0 0.0
    %95 = vmatprep.subr.mxu0 0.0
    %96 = vmatpush1.msra.mxu0 0.0
    %97 = vmatprep.subr.mxu0 0.0
    %98 = vmatpush1.msra.mxu0 0.0
    %99 = vmatprep.subr.mxu0 0.0
    %100 = vmatpush1.msra.mxu0 0.0
    %101 = vmatprep.subr.mxu0 0.0
    %102 = vmatpush1.msra.mxu0 0.0
    %103 = vmatprep.subr.mxu0 0.0
    %104 = vmatpush1.msra.mxu0 0.0
    %105 = vmatprep.mubr.f32.mxu0 0.0
    %v106 = vand.u32 %v31, 4294901760
    %v107 = vsub.f32 %v31, %v106
    %v108 = vand.u32 %v107, 4294901760
    %v109 = vsub.f32 %v107, %v108
    %v110 = vand.u32 %v109, 4294901760
    %111 = vmatmul.mubr.f32.gmra.mrb[0].mxu0 %v110
    %v112 = vpop.f32.mrb[0].mxu0
    %v113 = vadd.f32 0.0, %v112
    %v114 = vpop.f32.mrb[0].mxu0
    %115 = vdwg.mxu0
    %116 = vmatprep.subr.mxu0 0.0
    %v117 = vand.u32 %v21, 4294901760
    %v118 = vsub.f32 %v21, %v117
    %v119 = vand.u32 %v118, 4294901760
    %v120 = vsub.f32 %v118, %v119
    %v121 = vand.u32 %v120, 4294901760
    %122 = vmatpush1.msra.mxu0 %v121
    %123 = vmatprep.subr.mxu0 0.0
    %v124 = vand.u32 %v22, 4294901760
    %v125 = vsub.f32 %v22, %v124
    %v126 = vand.u32 %v125, 4294901760
    %v127 = vsub.f32 %v125, %v126
    %v128 = vand.u32 %v127, 4294901760
    %129 = vmatpush1.msra.mxu0 %v128
    %130 = vmatprep.subr.mxu0 0.0
    %v131 = vand.u32 %v23, 4294901760
    %v132 = vsub.f32 %v23, %v131
    %v133 = vand.u32 %v132, 4294901760
    %v134 = vsub.f32 %v132, %v133
    %v135 = vand.u32 %v134, 4294901760
    %136 = vmatpush1.msra.mxu0 %v135
    %137 = vmatprep.subr.mxu0 0.0
    %v138 = vand.u32 %v24, 4294901760
    %v139 = vsub.f32 %v24, %v138
    %v140 = vand.u32 %v139, 4294901760
    %v141 = vsub.f32 %v139, %v140
    %v142 = vand.u32 %v141, 4294901760
    %143 = vmatpush1.msra.mxu0 %v142
    %144 = vmatprep.subr.mxu0 0.0
    %v145 = vand.u32 %v25, 4294901760
    %v146 = vsub.f32 %v25, %v145
    %v147 = vand.u32 %v146, 4294901760
    %v148 = vsub.f32 %v146, %v147
    %v149 = vand.u32 %v148, 4294901760
    %150 = vmatpush1.msra.mxu0 %v149
    %151 = vmatprep.subr.mxu0 0.0
    %v152 = vand.u32 %v26, 4294901760
    %v153 = vsub.f32 %v26, %v152
    %v154 = vand.u32 %v153, 4294901760
    %v155 = vsub.f32 %v153, %v154
    %v156 = vand.u32 %v155, 4294901760
    %157 = vmatpush1.msra.mxu0 %v156
    %158 = vmatprep.subr.mxu0 0.0
    %v159 = vand.u32 %v27, 4294901760
    %v160 = vsub.f32 %v27, %v159
    %v161 = vand.u32 %v160, 4294901760
    %v162 = vsub.f32 %v160, %v161
    %v163 = vand.u32 %v162, 4294901760
    %164 = vmatpush1.msra.mxu0 %v163
    %165 = vmatprep.subr.mxu0 0.0
    %v166 = vand.u32 %v28, 4294901760
    %v167 = vsub.f32 %v28, %v166
    %v168 = vand.u32 %v167, 4294901760
    %v169 = vsub.f32 %v167, %v168
    %v170 = vand.u32 %v169, 4294901760
    %171 = vmatpush1.msra.mxu0 %v170
    %172 = vmatprep.subr.mxu0 0.0
    %173 = vmatpush1.msra.mxu0 0.0
    %174 = vmatprep.subr.mxu0 0.0
    %175 = vmatpush1.msra.mxu0 0.0
    %176 = vmatprep.subr.mxu0 0.0
    %177 = vmatpush1.msra.mxu0 0.0
    %178 = vmatprep.subr.mxu0 0.0
    %179 = vmatpush1.msra.mxu0 0.0
    %180 = vmatprep.subr.mxu0 0.0
    %181 = vmatpush1.msra.mxu0 0.0
    %182 = vmatprep.subr.mxu0 0.0
    %183 = vmatpush1.msra.mxu0 0.0
    %184 = vmatprep.subr.mxu0 0.0
    %185 = vmatpush1.msra.mxu0 0.0
    %186 = vmatprep.subr.mxu0 0.0
    %187 = vmatpush1.msra.mxu0 0.0
    %188 = vmatprep.subr.mxu0 0.0
    %189 = vmatpush1.msra.mxu0 0.0
    %190 = vmatprep.subr.mxu0 0.0
    %191 = vmatpush1.msra.mxu0 0.0
    %192 = vmatprep.subr.mxu0 0.0
    %193 = vmatpush1.msra.mxu0 0.0
    %194 = vmatprep.subr.mxu0 0.0
    %195 = vmatpush1.msra.mxu0 0.0
    %196 = vmatprep.subr.mxu0 0.0
    %197 = vmatpush1.msra.mxu0 0.0
    %198 = vmatprep.subr.mxu0 0.0
    %199 = vmatpush1.msra.mxu0 0.0
    %200 = vmatprep.subr.mxu0 0.0
    %201 = vmatpush1.msra.mxu0 0.0
    %202 = vmatprep.subr.mxu0 0.0
    %203 = vmatpush1.msra.mxu0 0.0
    %204 = vmatprep.subr.mxu0 0.0
    %205 = vmatpush1.msra.mxu0 0.0
    %206 = vmatprep.subr.mxu0 0.0
    %207 = vmatpush1.msra.mxu0 0.0
    %208 = vmatprep.subr.mxu0 0.0
    %209 = vmatpush1.msra.mxu0 0.0
    %210 = vmatprep.subr.mxu0 0.0
    %211 = vmatpush1.msra.mxu0 0.0
    %212 = vmatprep.subr.mxu0 0.0
    %213 = vmatpush1.msra.mxu0 0.0
    %214 = vmatprep.subr.mxu0 0.0
    %215 = vmatpush1.msra.mxu0 0.0
    %216 = vmatprep.subr.mxu0 0.0
    %217 = vmatpush1.msra.mxu0 0.0
    %218 = vmatprep.subr.mxu0 0.0
    %219 = vmatpush1.msra.mxu0 0.0
    %220 = vmatprep.mubr.f32.mxu0 0.0
    %v221 = vand.u32 %v31, 4294901760
    %222 = vmatmul.mubr.f32.gmra.mrb[0].mxu0 %v221
    %v223 = vpop.f32.mrb[0].mxu0
    %v224 = vadd.f32 %v113, %v223
    %v225 = vpop.f32.mrb[0].mxu0
    %226 = vdwg.mxu0
    %227 = vmatprep.subr.mxu0 0.0
    %v228 = vand.u32 %v21, 4294901760
    %v229 = vsub.f32 %v21, %v228
    %230 = vmatpush1.msra.mxu0 %v229
    %231 = vmatprep.subr.mxu0 0.0
    %v232 = vand.u32 %v22, 4294901760
    %v233 = vsub.f32 %v22, %v232
    %234 = vmatpush1.msra.mxu0 %v233
    %235 = vmatprep.subr.mxu0 0.0
    %v236 = vand.u32 %v23, 4294901760
    %v237 = vsub.f32 %v23, %v236
    %238 = vmatpush1.msra.mxu0 %v237
    %239 = vmatprep.subr.mxu0 0.0
    %v240 = vand.u32 %v24, 4294901760
    %v241 = vsub.f32 %v24, %v240
    %242 = vmatpush1.msra.mxu0 %v241
    %243 = vmatprep.subr.mxu0 0.0
    %v244 = vand.u32 %v25, 4294901760
    %v245 = vsub.f32 %v25, %v244
    %246 = vmatpush1.msra.mxu0 %v245
    %247 = vmatprep.subr.mxu0 0.0
    %v248 = vand.u32 %v26, 4294901760
    %v249 = vsub.f32 %v26, %v248
    %250 = vmatpush1.msra.mxu0 %v249
    %251 = vmatprep.subr.mxu0 0.0
    %v252 = vand.u32 %v27, 4294901760
    %v253 = vsub.f32 %v27, %v252
    %254 = vmatpush1.msra.mxu0 %v253
    %255 = vmatprep.subr.mxu0 0.0
    %v256 = vand.u32 %v28, 4294901760
    %v257 = vsub.f32 %v28, %v256
    %258 = vmatpush1.msra.mxu0 %v257
    %259 = vmatprep.subr.mxu0 0.0
    %260 = vmatpush1.msra.mxu0 0.0
    %261 = vmatprep.subr.mxu0 0.0
    %262 = vmatpush1.msra.mxu0 0.0
    %263 = vmatprep.subr.mxu0 0.0
    %264 = vmatpush1.msra.mxu0 0.0
    %265 = vmatprep.subr.mxu0 0.0
    %266 = vmatpush1.msra.mxu0 0.0
    %267 = vmatprep.subr.mxu0 0.0
    %268 = vmatpush1.msra.mxu0 0.0
    %269 = vmatprep.subr.mxu0 0.0
    %270 = vmatpush1.msra.mxu0 0.0
    %271 = vmatprep.subr.mxu0 0.0
    %272 = vmatpush1.msra.mxu0 0.0
    %273 = vmatprep.subr.mxu0 0.0
    %274 = vmatpush1.msra.mxu0 0.0
    %275 = vmatprep.subr.mxu0 0.0
    %276 = vmatpush1.msra.mxu0 0.0
    %277 = vmatprep.subr.mxu0 0.0
    %278 = vmatpush1.msra.mxu0 0.0
    %279 = vmatprep.subr.mxu0 0.0
    %280 = vmatpush1.msra.mxu0 0.0
    %281 = vmatprep.subr.mxu0 0.0
    %282 = vmatpush1.msra.mxu0 0.0
    %283 = vmatprep.subr.mxu0 0.0
    %284 = vmatpush1.msra.mxu0 0.0
    %285 = vmatprep.subr.mxu0 0.0
    %286 = vmatpush1.msra.mxu0 0.0
    %287 = vmatprep.subr.mxu0 0.0
    %288 = vmatpush1.msra.mxu0 0.0
    %289 = vmatprep.subr.mxu0 0.0
    %290 = vmatpush1.msra.mxu0 0.0
    %291 = vmatprep.subr.mxu0 0.0
    %292 = vmatpush1.msra.mxu0 0.0
    %293 = vmatprep.subr.mxu0 0.0
    %294 = vmatpush1.msra.mxu0 0.0
    %295 = vmatprep.subr.mxu0 0.0
    %296 = vmatpush1.msra.mxu0 0.0
    %297 = vmatprep.subr.mxu0 0.0
    %298 = vmatpush1.msra.mxu0 0.0
    %299 = vmatprep.subr.mxu0 0.0
    %300 = vmatpush1.msra.mxu0 0.0
    %301 = vmatprep.subr.mxu0 0.0
    %302 = vmatpush1.msra.mxu0 0.0
    %303 = vmatprep.subr.mxu0 0.0
    %304 = vmatpush1.msra.mxu0 0.0
    %305 = vmatprep.subr.mxu0 0.0
    %306 = vmatpush1.msra.mxu0 0.0
    %307 = vmatprep.mubr.f32.mxu0 0.0
    %v308 = vand.u32 %v31, 4294901760
    %v309 = vsub.f32 %v31, %v308
    %310 = vmatmul.mubr.f32.gmra.mrb[0].mxu0 %v309
    %v311 = vpop.f32.mrb[0].mxu0
    %v312 = vadd.f32 %v224, %v311
    %v313 = vpop.f32.mrb[0].mxu0
    %314 = vdwg.mxu0
    %315 = vmatprep.subr.mxu0 0.0
    %v316 = vand.u32 %v21, 4294901760
    %317 = vmatpush1.msra.mxu0 %v316
    %318 = vmatprep.subr.mxu0 0.0
    %v319 = vand.u32 %v22, 4294901760
    %320 = vmatpush1.msra.mxu0 %v319
    %321 = vmatprep.subr.mxu0 0.0
    %v322 = vand.u32 %v23, 4294901760
    %323 = vmatpush1.msra.mxu0 %v322
    %324 = vmatprep.subr.mxu0 0.0
    %v325 = vand.u32 %v24, 4294901760
    %326 = vmatpush1.msra.mxu0 %v325
    %327 = vmatprep.subr.mxu0 0.0
    %v328 = vand.u32 %v25, 4294901760
    %329 = vmatpush1.msra.mxu0 %v328
    %330 = vmatprep.subr.mxu0 0.0
    %v331 = vand.u32 %v26, 4294901760
    %332 = vmatpush1.msra.mxu0 %v331
    %333 = vmatprep.subr.mxu0 0.0
    %v334 = vand.u32 %v27, 4294901760
    %335 = vmatpush1.msra.mxu0 %v334
    %336 = vmatprep.subr.mxu0 0.0
    %v337 = vand.u32 %v28, 4294901760
    %338 = vmatpush1.msra.mxu0 %v337
    %339 = vmatprep.subr.mxu0 0.0
    %340 = vmatpush1.msra.mxu0 0.0
    %341 = vmatprep.subr.mxu0 0.0
    %342 = vmatpush1.msra.mxu0 0.0
    %343 = vmatprep.subr.mxu0 0.0
    %344 = vmatpush1.msra.mxu0 0.0
    %345 = vmatprep.subr.mxu0 0.0
    %346 = vmatpush1.msra.mxu0 0.0
    %347 = vmatprep.subr.mxu0 0.0
    %348 = vmatpush1.msra.mxu0 0.0
    %349 = vmatprep.subr.mxu0 0.0
    %350 = vmatpush1.msra.mxu0 0.0
    %351 = vmatprep.subr.mxu0 0.0
    %352 = vmatpush1.msra.mxu0 0.0
    %353 = vmatprep.subr.mxu0 0.0
    %354 = vmatpush1.msra.mxu0 0.0
    %355 = vmatprep.subr.mxu0 0.0
    %356 = vmatpush1.msra.mxu0 0.0
    %357 = vmatprep.subr.mxu0 0.0
    %358 = vmatpush1.msra.mxu0 0.0
    %359 = vmatprep.subr.mxu0 0.0
    %360 = vmatpush1.msra.mxu0 0.0
    %361 = vmatprep.subr.mxu0 0.0
    %362 = vmatpush1.msra.mxu0 0.0
    %363 = vmatprep.subr.mxu0 0.0
    %364 = vmatpush1.msra.mxu0 0.0
    %365 = vmatprep.subr.mxu0 0.0
    %366 = vmatpush1.msra.mxu0 0.0
    %367 = vmatprep.subr.mxu0 0.0
    %368 = vmatpush1.msra.mxu0 0.0
    %369 = vmatprep.subr.mxu0 0.0
    %370 = vmatpush1.msra.mxu0 0.0
    %371 = vmatprep.subr.mxu0 0.0
    %372 = vmatpush1.msra.mxu0 0.0
    %373 = vmatprep.subr.mxu0 0.0
    %374 = vmatpush1.msra.mxu0 0.0
    %375 = vmatprep.subr.mxu0 0.0
    %376 = vmatpush1.msra.mxu0 0.0
    %377 = vmatprep.subr.mxu0 0.0
    %378 = vmatpush1.msra.mxu0 0.0
    %379 = vmatprep.subr.mxu0 0.0
    %380 = vmatpush1.msra.mxu0 0.0
    %381 = vmatprep.subr.mxu0 0.0
    %382 = vmatpush1.msra.mxu0 0.0
    %383 = vmatprep.subr.mxu0 0.0
    %384 = vmatpush1.msra.mxu0 0.0
    %385 = vmatprep.subr.mxu0 0.0
    %386 = vmatpush1.msra.mxu0 0.0
    %387 = vmatprep.mubr.f32.mxu0 0.0
    %v388 = vand.u32 %v31, 4294901760
    %v389 = vsub.f32 %v31, %v388
    %v390 = vand.u32 %v389, 4294901760
    %391 = vmatmul.mubr.f32.gmra.mrb[0].mxu0 %v390
    %v392 = vpop.f32.mrb[0].mxu0
    %v393 = vadd.f32 %v312, %v392
    %v394 = vpop.f32.mrb[0].mxu0
    %395 = vdwg.mxu0
    %396 = vmatprep.subr.mxu0 0.0
    %v397 = vand.u32 %v21, 4294901760
    %v398 = vsub.f32 %v21, %v397
    %v399 = vand.u32 %v398, 4294901760
    %400 = vmatpush1.msra.mxu0 %v399
    %401 = vmatprep.subr.mxu0 0.0
    %v402 = vand.u32 %v22, 4294901760
    %v403 = vsub.f32 %v22, %v402
    %v404 = vand.u32 %v403, 4294901760
    %405 = vmatpush1.msra.mxu0 %v404
    %406 = vmatprep.subr.mxu0 0.0
    %v407 = vand.u32 %v23, 4294901760
    %v408 = vsub.f32 %v23, %v407
    %v409 = vand.u32 %v408, 4294901760
    %410 = vmatpush1.msra.mxu0 %v409
    %411 = vmatprep.subr.mxu0 0.0
    %v412 = vand.u32 %v24, 4294901760
    %v413 = vsub.f32 %v24, %v412
    %v414 = vand.u32 %v413, 4294901760
    %415 = vmatpush1.msra.mxu0 %v414
    %416 = vmatprep.subr.mxu0 0.0
    %v417 = vand.u32 %v25, 4294901760
    %v418 = vsub.f32 %v25, %v417
    %v419 = vand.u32 %v418, 4294901760
    %420 = vmatpush1.msra.mxu0 %v419
    %421 = vmatprep.subr.mxu0 0.0
    %v422 = vand.u32 %v26, 4294901760
    %v423 = vsub.f32 %v26, %v422
    %v424 = vand.u32 %v423, 4294901760
    %425 = vmatpush1.msra.mxu0 %v424
    %426 = vmatprep.subr.mxu0 0.0
    %v427 = vand.u32 %v27, 4294901760
    %v428 = vsub.f32 %v27, %v427
    %v429 = vand.u32 %v428, 4294901760
    %430 = vmatpush1.msra.mxu0 %v429
    %431 = vmatprep.subr.mxu0 0.0
    %v432 = vand.u32 %v28, 4294901760
    %v433 = vsub.f32 %v28, %v432
    %v434 = vand.u32 %v433, 4294901760
    %435 = vmatpush1.msra.mxu0 %v434
    %436 = vmatprep.subr.mxu0 0.0
    %437 = vmatpush1.msra.mxu0 0.0
    %438 = vmatprep.subr.mxu0 0.0
    %439 = vmatpush1.msra.mxu0 0.0
    %440 = vmatprep.subr.mxu0 0.0
    %441 = vmatpush1.msra.mxu0 0.0
    %442 = vmatprep.subr.mxu0 0.0
    %443 = vmatpush1.msra.mxu0 0.0
    %444 = vmatprep.subr.mxu0 0.0
    %445 = vmatpush1.msra.mxu0 0.0
    %446 = vmatprep.subr.mxu0 0.0
    %447 = vmatpush1.msra.mxu0 0.0
    %448 = vmatprep.subr.mxu0 0.0
    %449 = vmatpush1.msra.mxu0 0.0
    %450 = vmatprep.subr.mxu0 0.0
    %451 = vmatpush1.msra.mxu0 0.0
    %452 = vmatprep.subr.mxu0 0.0
    %453 = vmatpush1.msra.mxu0 0.0
    %454 = vmatprep.subr.mxu0 0.0
    %455 = vmatpush1.msra.mxu0 0.0
    %456 = vmatprep.subr.mxu0 0.0
    %457 = vmatpush1.msra.mxu0 0.0
    %458 = vmatprep.subr.mxu0 0.0
    %459 = vmatpush1.msra.mxu0 0.0
    %460 = vmatprep.subr.mxu0 0.0
    %461 = vmatpush1.msra.mxu0 0.0
    %462 = vmatprep.subr.mxu0 0.0
    %463 = vmatpush1.msra.mxu0 0.0
    %464 = vmatprep.subr.mxu0 0.0
    %465 = vmatpush1.msra.mxu0 0.0
    %466 = vmatprep.subr.mxu0 0.0
    %467 = vmatpush1.msra.mxu0 0.0
    %468 = vmatprep.subr.mxu0 0.0
    %469 = vmatpush1.msra.mxu0 0.0
    %470 = vmatprep.subr.mxu0 0.0
    %471 = vmatpush1.msra.mxu0 0.0
    %472 = vmatprep.subr.mxu0 0.0
    %473 = vmatpush1.msra.mxu0 0.0
    %474 = vmatprep.subr.mxu0 0.0
    %475 = vmatpush1.msra.mxu0 0.0
    %476 = vmatprep.subr.mxu0 0.0
    %477 = vmatpush1.msra.mxu0 0.0
    %478 = vmatprep.subr.mxu0 0.0
    %479 = vmatpush1.msra.mxu0 0.0
    %480 = vmatprep.subr.mxu0 0.0
    %481 = vmatpush1.msra.mxu0 0.0
    %482 = vmatprep.subr.mxu0 0.0
    %483 = vmatpush1.msra.mxu0 0.0
    %484 = vmatprep.mubr.f32.mxu0 0.0
    %v485 = vand.u32 %v31, 4294901760
    %486 = vmatmul.mubr.f32.gmra.mrb[0].mxu0 %v485
    %v487 = vpop.f32.mrb[0].mxu0
    %v488 = vadd.f32 %v393, %v487
    %v489 = vpop.f32.mrb[0].mxu0
    %490 = vdwg.mxu0
    %491 = vmatprep.subr.mxu0 0.0
    %v492 = vand.u32 %v21, 4294901760
    %493 = vmatpush1.msra.mxu0 %v492
    %494 = vmatprep.subr.mxu0 0.0
    %v495 = vand.u32 %v22, 4294901760
    %496 = vmatpush1.msra.mxu0 %v495
    %497 = vmatprep.subr.mxu0 0.0
    %v498 = vand.u32 %v23, 4294901760
    %499 = vmatpush1.msra.mxu0 %v498
    %500 = vmatprep.subr.mxu0 0.0
    %v501 = vand.u32 %v24, 4294901760
    %502 = vmatpush1.msra.mxu0 %v501
    %503 = vmatprep.subr.mxu0 0.0
    %v504 = vand.u32 %v25, 4294901760
    %505 = vmatpush1.msra.mxu0 %v504
    %506 = vmatprep.subr.mxu0 0.0
    %v507 = vand.u32 %v26, 4294901760
    %508 = vmatpush1.msra.mxu0 %v507
    %509 = vmatprep.subr.mxu0 0.0
    %v510 = vand.u32 %v27, 4294901760
    %511 = vmatpush1.msra.mxu0 %v510
    %512 = vmatprep.subr.mxu0 0.0
    %v513 = vand.u32 %v28, 4294901760
    %514 = vmatpush1.msra.mxu0 %v513
    %515 = vmatprep.subr.mxu0 0.0
    %516 = vmatpush1.msra.mxu0 0.0
    %517 = vmatprep.subr.mxu0 0.0
    %518 = vmatpush1.msra.mxu0 0.0
    %519 = vmatprep.subr.mxu0 0.0
    %520 = vmatpush1.msra.mxu0 0.0
    %521 = vmatprep.subr.mxu0 0.0
    %522 = vmatpush1.msra.mxu0 0.0
    %523 = vmatprep.subr.mxu0 0.0
    %524 = vmatpush1.msra.mxu0 0.0
    %525 = vmatprep.subr.mxu0 0.0
    %526 = vmatpush1.msra.mxu0 0.0
    %527 = vmatprep.subr.mxu0 0.0
    %528 = vmatpush1.msra.mxu0 0.0
    %529 = vmatprep.subr.mxu0 0.0
    %530 = vmatpush1.msra.mxu0 0.0
    %531 = vmatprep.subr.mxu0 0.0
    %532 = vmatpush1.msra.mxu0 0.0
    %533 = vmatprep.subr.mxu0 0.0
    %534 = vmatpush1.msra.mxu0 0.0
    %535 = vmatprep.subr.mxu0 0.0
    %536 = vmatpush1.msra.mxu0 0.0
    %537 = vmatprep.subr.mxu0 0.0
    %538 = vmatpush1.msra.mxu0 0.0
    %539 = vmatprep.subr.mxu0 0.0
    %540 = vmatpush1.msra.mxu0 0.0
    %541 = vmatprep.subr.mxu0 0.0
    %542 = vmatpush1.msra.mxu0 0.0
    %543 = vmatprep.subr.mxu0 0.0
    %544 = vmatpush1.msra.mxu0 0.0
    %545 = vmatprep.subr.mxu0 0.0
    %546 = vmatpush1.msra.mxu0 0.0
    %547 = vmatprep.subr.mxu0 0.0
    %548 = vmatpush1.msra.mxu0 0.0
    %549 = vmatprep.subr.mxu0 0.0
    %550 = vmatpush1.msra.mxu0 0.0
    %551 = vmatprep.subr.mxu0 0.0
    %552 = vmatpush1.msra.mxu0 0.0
    %553 = vmatprep.subr.mxu0 0.0
    %554 = vmatpush1.msra.mxu0 0.0
    %555 = vmatprep.subr.mxu0 0.0
    %556 = vmatpush1.msra.mxu0 0.0
    %557 = vmatprep.subr.mxu0 0.0
    %558 = vmatpush1.msra.mxu0 0.0
    %559 = vmatprep.subr.mxu0 0.0
    %560 = vmatpush1.msra.mxu0 0.0
    %561 = vmatprep.subr.mxu0 0.0
    %562 = vmatpush1.msra.mxu0 0.0
    %563 = vmatprep.mubr.f32.mxu0 0.0
    %v564 = vand.u32 %v31, 4294901760
    %565 = vmatmul.mubr.f32.gmra.mrb[0].mxu0 %v564
    %v566 = vpop.f32.mrb[0].mxu0
    %v567 = vadd.f32 %v488, %v566
    %v568 = vpop.f32.mrb[0].mxu0
    %569 = vdwg.mxu0
    %vm570 = vcmask 261120
    %571 = vst.msk [vmem:[#allocation2] sm:$0xff] %vm570, %v567
    // Predicated region
    $region10: #{tpu_custom_call.1} parent=1 // pred_check
      _
    $region11: #{tpu_custom_call.1} parent=1 // pred_check_branch
      %573 = sbr.rel (0) target = $region13
    $region12: #{tpu_custom_call.1} parent=1 // pred_region
      %s575 = ssub.s32 128, 128
      %576 = vsyncadd [#allocation3], %s575
      %s578 = sshll.u32 [#allocation2], 4
      %s579 = int_to_ptr.vmem [resolvable:$true] %s578
      %581 = dma.vmem_to_hbm [thread:$0]  %s579, 128, %s2, [#allocation3]
    $region13: #{tpu_custom_call.1} parent=1 // pred_fallthru
      _
    // Predicated region
    $region14: #{tpu_custom_call.1} parent=1 // pred_check
      _
    $region15: #{tpu_custom_call.1} parent=1 // pred_check_branch
      %583 = sbr.rel (0) target = $region17
    $region16: #{tpu_custom_call.1} parent=1 // pred_region
      %584 = dma.done [#allocation3], 128
    $region17: #{tpu_custom_call.1} parent=1 // pred_fallthru
      _
    %585 = vsyncpa [#allocation3], 1

</llo_original>
